<compile_context>
chip_gen: v5e
topology: v5e:2x2
jax: 0.10.0
libtpu: 0.0.40
codegen_flags: <defaults>
</compile_context>

<pallas_src>
import jax
import jax.numpy as jnp
from jax.experimental import pallas as pl
from jax.experimental.pallas import tpu as pltpu


_EPS = 1e-12  # matches torch.nn.functional.normalize default eps
_VMEM_LIMIT = 40 * 1024 * 1024   # scoped VMEM request, safe on v5e/v6e/v7x
_TILE_BUDGET = 24 * 1024 * 1024  # bytes allowed for double-buffered x tiles


def _sublane(dtype):
    itemsize = jnp.dtype(dtype).itemsize
    return max(8, 32 // itemsize)  # 8 for f32, 16 for bf16, 32 for int8/fp8


def _pick_block_rows(n, d, dtype):
    """Pick a row-tile size: big enough to amortize grid-step overhead,
    small enough that double-buffered input tiles fit comfortably in VMEM."""
    itemsize = jnp.dtype(dtype).itemsize
    sub = _sublane(dtype)
    n_sub = pl.cdiv(n, sub) * sub
    max_rows_vmem = max(sub, _TILE_BUDGET // (2 * d * itemsize))
    bm = min(n_sub, 1024, max_rows_vmem)
    bm = max(sub, (bm // sub) * sub)
    n_pad = pl.cdiv(n_sub, bm) * bm
    return bm, n_pad


def _compiler_params():
    return pltpu.CompilerParams(
        dimension_semantics=("parallel",),
        vmem_limit_bytes=_VMEM_LIMIT,
    )


# ----------------------------- cosine scoring ------------------------------

def _cosine_kernel(x_ref, q_ref, o_ref):
    x = x_ref[...].astype(jnp.float32)                                    # (bm, D)
    q = q_ref[...].astype(jnp.float32)                                    # (1, D)
    q_nrm = jnp.maximum(jnp.sqrt(jnp.sum(q * q, axis=1, keepdims=True)), _EPS)   # (1, 1)
    x_nrm = jnp.maximum(jnp.sqrt(jnp.sum(x * x, axis=1, keepdims=True)), _EPS)   # (bm, 1)
    dots = jnp.sum(x * q, axis=1, keepdims=True)                          # (bm, 1)
    o_ref[...] = (dots / (x_nrm * q_nrm)).astype(o_ref.dtype)


def cosine_scores(x, query):
    """scores = normalize(x, dim=1) @ normalize(query)  -> shape (N,)"""
    n, d = x.shape
    q2 = query.reshape(1, d)
    bm, n_pad = _pick_block_rows(n, d, x.dtype)
    if n_pad != n:
        x = jnp.pad(x, ((0, n_pad - n), (0, 0)))
    out = pl.pallas_call(
        _cosine_kernel,
        out_shape=jax.ShapeDtypeStruct((n_pad, 1), jnp.float32),
        grid=(n_pad // bm,),
        in_specs=[
            pl.BlockSpec((bm, d), lambda i: (i, 0)),
            pl.BlockSpec((1, d), lambda i: (0, 0)),
        ],
        out_specs=pl.BlockSpec((bm, 1), lambda i: (i, 0)),
        compiler_params=_compiler_params(),
    )(x, q2)
    return out[:n, 0]


# ------------------------------- mlp scoring -------------------------------

def _mlp_kernel(x_ref, w1x_ref, qh_ref, w2_ref, b2_ref, o_ref):
    x = x_ref[...].astype(jnp.float32)                                    # (bm, D)
    # hidden = relu(x @ W1_x + (q @ W1_q + b1))
    h = jnp.dot(x, w1x_ref[...].astype(jnp.float32),
                preferred_element_type=jnp.float32) + qh_ref[...]         # (bm, H)
    h = jnp.maximum(h, 0.0)
    s = jnp.dot(h, w2_ref[...].astype(jnp.float32),
                preferred_element_type=jnp.float32) + b2_ref[...]         # (bm, 1)
    o_ref[...] = s.astype(o_ref.dtype)


def mlp_scores(x, query, w1, b1, w2, b2):
    """scores = Lin(H,1)(ReLU(Lin(2H,H)(concat([x, q_rep], 1))))  -> (N, 1)

    w1: (2D, H), b1: (H,), w2: (H, 1), b2: (1,)  (math layout, x @ W + b).
    The concat is split: concat([x, q]) @ W1 == x @ W1[:D] + q @ W1[D:].
    The query half (identical for every node) is folded once in the wrapper.
    """
    n, d = x.shape
    h = w1.shape[1]
    w1x = w1[:d, :]                                                       # (D, H)
    qh = (query @ w1[d:, :] + b1).astype(jnp.float32).reshape(1, h)       # (1, H)
    w2r = w2.reshape(h, 1)
    b2r = b2.astype(jnp.float32).reshape(1, 1)

    bm, n_pad = _pick_block_rows(n, d, x.dtype)
    if n_pad != n:
        x = jnp.pad(x, ((0, n_pad - n), (0, 0)))
    out = pl.pallas_call(
        _mlp_kernel,
        out_shape=jax.ShapeDtypeStruct((n_pad, 1), jnp.float32),
        grid=(n_pad // bm,),
        in_specs=[
            pl.BlockSpec((bm, d), lambda i: (i, 0)),
            pl.BlockSpec((d, h), lambda i: (0, 0)),
            pl.BlockSpec((1, h), lambda i: (0, 0)),
            pl.BlockSpec((h, 1), lambda i: (0, 0)),
            pl.BlockSpec((1, 1), lambda i: (0, 0)),
        ],
        out_specs=pl.BlockSpec((bm, 1), lambda i: (i, 0)),
        compiler_params=_compiler_params(),
    )(x, w1x, qh, w2r, b2r)
    return out[:n, :]


# --------------------------- module-level forward ---------------------------

def reranking_decoder_forward(batch, params=None, scoring_method="cosine"):
    """batch: list of {"x": [N_i, H], "query": [H]} graphs.
    Returns the same graphs with "scores" attached (cosine: [N_i], mlp: [N_i,1])."""
    if scoring_method not in ("cosine", "mlp"):
        raise ValueError("scoring_method must be either 'cosine' or 'mlp'")
    new_batch = []
    for graph in batch:
        x, q = graph["x"], graph["query"]
        if scoring_method == "cosine":
            scores = cosine_scores(x, q)
        else:
            scores = mlp_scores(x, q, params["w1"], params["b1"],
                                params["w2"], params["b2"])
        g = dict(graph)
        g["scores"] = scores
        new_batch.append(g)
    return new_batch


# ------------------------------ pure-JAX refs ------------------------------

def _cosine_ref(x, q):
    xn = x / jnp.maximum(jnp.linalg.norm(x, axis=1, keepdims=True), _EPS)
    qn = q / jnp.maximum(jnp.linalg.norm(q), _EPS)
    return xn @ qn


def _mlp_ref(x, q, w1, b1, w2, b2):
    q_rep = jnp.broadcast_to(q[None, :], (x.shape[0], q.shape[0]))
    xc = jnp.concatenate([x, q_rep], axis=1)
    hid = jnp.maximum(xc @ w1 + b1, 0.0)
    return hid @ w2.reshape(-1, 1) + b2.reshape(1, 1)


if __name__ == "__main__":
    key = jax.random.PRNGKey(0)
    k = jax.random.split(key, 8)

    hidden = 32
    # Two small graphs with different node counts (mimics Batch.to_data_list()).
    batch = [
        {"x": jax.random.normal(k[0], (6, hidden), dtype=jnp.float32),
         "query": jax.random.normal(k[1], (hidden,), dtype=jnp.float32)},
        {"x": jax.random.normal(k[2], (10, hidden), dtype=jnp.float32),
         "query": jax.random.normal(k[3], (hidden,), dtype=jnp.float32)},
    ]
    # MLP scorer params: Linear(2H, H) -> ReLU -> Linear(H, 1), math layout.
    params = {
        "w1": 0.1 * jax.random.normal(k[4], (2 * hidden, hidden), dtype=jnp.float32),
        "b1": 0.1 * jax.random.normal(k[5], (hidden,), dtype=jnp.float32),
        "w2": 0.1 * jax.random.normal(k[6], (hidden, 1), dtype=jnp.float32),
        "b2": 0.1 * jax.random.normal(k[7], (1,), dtype=jnp.float32),
    }

    # cosine path (module default)
    out_cos = reranking_decoder_forward(batch, scoring_method="cosine")
    out_cos = jax.block_until_ready(out_cos)
    for g_in, g_out in zip(batch, out_cos):
        ref = _cosine_ref(g_in["x"], g_in["query"])
        assert g_out["scores"].shape == (g_in["x"].shape[0],)
        assert bool(jnp.allclose(g_out["scores"], ref, atol=1e-5, rtol=1e-5))

    # mlp path
    out_mlp = reranking_decoder_forward(batch, params=params, scoring_method="mlp")
    out_mlp = jax.block_until_ready(out_mlp)
    for g_in, g_out in zip(batch, out_mlp):
        ref = _mlp_ref(g_in["x"], g_in["query"], params["w1"], params["b1"],
                       params["w2"], params["b2"])
        assert g_out["scores"].shape == (g_in["x"].shape[0], 1)
        assert bool(jnp.allclose(g_out["scores"], ref, atol=1e-5, rtol=1e-5))

    print("KERNEL_OK")
</pallas_src>

<mosaic_0001>
module attributes {stable_mosaic.version = 11 : i64} {
  func.func @_cosine_kernel(%arg0: i32, %arg1: memref<8x32xf32, #tpu.memory_space<vmem>>, %arg2: memref<1x32xf32, #tpu.memory_space<vmem>>, %arg3: memref<8x1xf32, #tpu.memory_space<vmem>>) attributes {dimension_semantics = [#tpu.dimension_semantics<parallel>], iteration_bounds = array<i64: 1>, scalar_prefetch = 0 : i64, scratch_operands = 0 : i64, tpu.core_type = #tpu.core_type<tc>, window_params = [{transform_indices = @transform_0, window_bounds = array<i64: 8, 32>}, {pipeline_mode = #tpu.pipeline_mode<synchronous>, transform_indices = @transform_1, window_bounds = array<i64: 1, 32>}, {transform_indices = @transform_2, window_bounds = array<i64: 8, 1>}]} {
    %c0 = arith.constant 0 : index
    %c0_0 = arith.constant 0 : index
    %0 = vector.load %arg1[%c0, %c0_0] : memref<8x32xf32, #tpu.memory_space<vmem>>, vector<8x32xf32>
    %c0_1 = arith.constant 0 : index
    %c0_2 = arith.constant 0 : index
    %1 = vector.load %arg2[%c0_1, %c0_2] : memref<1x32xf32, #tpu.memory_space<vmem>>, vector<1x32xf32>
    %2 = arith.mulf %1, %1 : vector<1x32xf32>
    %cst = arith.constant dense<0.000000e+00> : vector<1xf32>
    %3 = vector.multi_reduction <add>, %2, %cst [1] : vector<1x32xf32> to vector<1xf32>
    %4 = vector.shape_cast %3 : vector<1xf32> to vector<1x1xf32>
    %5 = math.sqrt %4 : vector<1x1xf32>
    %cst_3 = arith.constant 9.99999996E-13 : f32
    %6 = vector.broadcast %cst_3 : f32 to vector<1x1xf32>
    %7 = arith.maximumf %5, %6 : vector<1x1xf32>
    %8 = arith.mulf %0, %0 : vector<8x32xf32>
    %cst_4 = arith.constant dense<0.000000e+00> : vector<8xf32>
    %9 = vector.multi_reduction <add>, %8, %cst_4 [1] : vector<8x32xf32> to vector<8xf32>
    %10 = vector.shape_cast %9 : vector<8xf32> to vector<8x1xf32>
    %11 = math.sqrt %10 : vector<8x1xf32>
    %cst_5 = arith.constant 9.99999996E-13 : f32
    %12 = vector.broadcast %cst_5 : f32 to vector<8x1xf32>
    %13 = arith.maximumf %11, %12 : vector<8x1xf32>
    %14 = vector.broadcast %1 : vector<1x32xf32> to vector<8x32xf32>
    %15 = arith.mulf %0, %14 : vector<8x32xf32>
    %cst_6 = arith.constant dense<0.000000e+00> : vector<8xf32>
    %16 = vector.multi_reduction <add>, %15, %cst_6 [1] : vector<8x32xf32> to vector<8xf32>
    %17 = vector.shape_cast %16 : vector<8xf32> to vector<8x1xf32>
    %18 = vector.broadcast %7 : vector<1x1xf32> to vector<8x1xf32>
    %19 = arith.mulf %13, %18 : vector<8x1xf32>
    %20 = arith.divf %17, %19 : vector<8x1xf32>
    %c0_7 = arith.constant 0 : index
    %c0_8 = arith.constant 0 : index
    %21 = vector.load %arg3[%c0_7, %c0_8] : memref<8x1xf32, #tpu.memory_space<vmem>>, vector<8x1xf32>
    tpu.vector_store %arg3[%c0_7, %c0_8], %20 {strides = array<i32>} : memref<8x1xf32, #tpu.memory_space<vmem>>, vector<8x1xf32>,
    return
  }
  func.func @transform_0(%arg0: i32) -> (i32, i32) {
    %c0_i32 = arith.constant 0 : i32
    %c0_i32_0 = arith.constant 0 : i32
    return %arg0, %c0_i32 : i32, i32
  }
  func.func @transform_1(%arg0: i32) -> (i32, i32) {
    %c0_i32 = arith.constant 0 : i32
    %c0_i32_0 = arith.constant 0 : i32
    %c0_i32_1 = arith.constant 0 : i32
    return %c0_i32, %c0_i32_0 : i32, i32
  }
  func.func @transform_2(%arg0: i32) -> (i32, i32) {
    %c0_i32 = arith.constant 0 : i32
    %c0_i32_0 = arith.constant 0 : i32
    return %arg0, %c0_i32 : i32, i32
  }
}

</mosaic_0001>

<llo_original>
// kernel: tpu_custom_call.1
$region0: #{tpu_custom_call.1}
  #allocation0 [shape = 'u32[]', space=smem, size = 0x4, offset = 0x4, fixed_abs, tag = 'smem constant byte address 0x4 - core index']
  #allocation1 [shape = 'u32[72,128]{1,0:T(1,128)}', space=vmem, size = 0x9000, scoped, tag = 'internal scratch']
  %s0 = inlined_call_operand.hbm [shape: f32[8,32], index: 0, kind: input, shape index: {}]
  %s1 = inlined_call_operand.hbm [shape: f32[1,32], index: 1, kind: input, shape index: {}]
  %s2 = inlined_call_operand.vmem [shape: f32[8,1], index: 2, kind: output, shape index: {}]
  %s3 = sld [smem:[#allocation0]]
  $region26: #{tpu_custom_call.1} parent=0
    _
  %s5 = ssub.s32 1, %s3
  %s6 = scalar_select 0, %s5, %s3
  $region1: #{tpu_custom_call.1} parent=0
    #allocation2 [shape = 'u8[4096]{0}', space=vmem, size = 0x1000, scoped, tag = 'input window, operand 0, single buffered']
    #allocation3 [shape = 's32[1]{0}', space=sflag, size = 0x4, scoped, tag = 'scoped memory for tpu_custom_call.1']
    #allocation4 [shape = 'u8[512]{0}', space=vmem, size = 0x400, scoped, tag = 'input window, operand 1, single buffered']
    #allocation5 [shape = 's32[1]{0}', space=sflag, size = 0x4, scoped, tag = 'scoped memory for tpu_custom_call.1']
    %7 = vsyncpa [#allocation3], 0
    %8 = vsyncpa [#allocation5], 0
    // Predicated region
    $region2: #{tpu_custom_call.1} parent=1 // pred_check
      _
    $region3: #{tpu_custom_call.1} parent=1 // pred_check_branch
      %10 = sbr.rel (0) target = $region5
    $region4: #{tpu_custom_call.1} parent=1 // pred_region
      %12 = vsyncadd [#allocation3], 0
      %s14 = sshll.u32 %s0, 4
      %s15 = int_to_ptr.hbm [resolvable:$true] %s14
      %s16 = sshll.u32 [#allocation2], 4
      %s17 = int_to_ptr.vmem [resolvable:$true] %s16
      %19 = dma.hbm_to_vmem [thread:$0]  %s15, 128, %s17, [#allocation3]
    $region5: #{tpu_custom_call.1} parent=1 // pred_fallthru
      _
    // Predicated region
    $region6: #{tpu_custom_call.1} parent=1 // pred_check
      _
    $region7: #{tpu_custom_call.1} parent=1 // pred_check_branch
      %21 = sbr.rel (0) target = $region9
    $region8: #{tpu_custom_call.1} parent=1 // pred_region
      %23 = vsyncadd [#allocation5], 0
      %s25 = sshll.u32 %s1, 4
      %s26 = int_to_ptr.hbm [resolvable:$true] %s25
      %s27 = sshll.u32 [#allocation4], 4
      %s28 = int_to_ptr.vmem [resolvable:$true] %s27
      %30 = dma.hbm_to_vmem [thread:$0]  %s26, 16, %s28, [#allocation5]
    $region9: #{tpu_custom_call.1} parent=1 // pred_fallthru
      _
    // Predicated region
    $region10: #{tpu_custom_call.1} parent=1 // pred_check
      _
    $region11: #{tpu_custom_call.1} parent=1 // pred_check_branch
      %32 = sbr.rel (0) target = $region13
    $region12: #{tpu_custom_call.1} parent=1 // pred_region
      %34 = dma.done [#allocation3], 128
    $region13: #{tpu_custom_call.1} parent=1 // pred_fallthru
      _
    // Predicated region
    $region14: #{tpu_custom_call.1} parent=1 // pred_check
      _
    $region15: #{tpu_custom_call.1} parent=1 // pred_check_branch
      %36 = sbr.rel (0) target = $region17
    $region16: #{tpu_custom_call.1} parent=1 // pred_region
      %38 = dma.done [#allocation5], 16
    $region17: #{tpu_custom_call.1} parent=1 // pred_fallthru
      _
    %v39 = vld [vmem:[#allocation2] sm:$0xff]
    %v40 = vld [vmem:[#allocation4] sm:$0x1]
    %v41 = vmul.f32 %v40, %v40
    %vm42 = vcmask 253952
    %v43 = vsel %vm42, %v41, 0.0
    %44 = vadd.xlane.f32.xlu0 %v43
    %v45 = vpop.xlane.xlu0 %44
    %v46 = vrsqrt.pop %v45
    %v47 = vmul.f32 %v46, %v45
    %v48 = vmul.f32 %v47, %v46
    %v49 = vmul.f32 0.5, %v48
    %v50 = vsub.f32 1.5, %v49
    %v51 = vmul.f32 %v46, %v50
    %v52 = vmul.f32 %v45, %v51
    %vm53 = vcmp.eq.f32.partialorder %v45, inf
    %v54 = vsel %vm53, %v45, %v52
    %vm55 = vcmp.eq.f32.partialorder %v45, 0.0
    %v56 = vand.u32 %v45, 2147483648
    %v57 = vsel %vm55, %v56, %v54
    %v58 = vmax.f32 %v57, 1e-12
    %v59 = vmul.f32 %v39, %v39
    %vm60 = vcmask 261120
    %v61 = vsel %vm60, %v59, 0.0
    %62 = vadd.xlane.f32.xlu0 %v61
    %v63 = vpop.xlane.xlu0 %62
    %v64 = vrsqrt.pop %v63
    %v65 = vmul.f32 %v64, %v63
    %v66 = vmul.f32 %v65, %v64
    %v67 = vmul.f32 0.5, %v66
    %v68 = vsub.f32 1.5, %v67
    %v69 = vmul.f32 %v64, %v68
    %v70 = vmul.f32 %v63, %v69
    %vm71 = vcmp.eq.f32.partialorder %v63, inf
    %v72 = vsel %vm71, %v63, %v70
    %vm73 = vcmp.eq.f32.partialorder %v63, 0.0
    %v74 = vand.u32 %v63, 2147483648
    %v75 = vsel %vm73, %v74, %v72
    %v76 = vmax.f32 %v75, 1e-12
    %v78 = vperm.slane %v40, 0
    %v80 = vmul.f32 %v39, %v78
    %v81 = vsel %vm60, %v80, 0.0
    %82 = vadd.xlane.f32.xlu0 %v81
    %v83 = vpop.xlane.xlu0 %82
    %v84 = vperm.slane %v58, 0
    %v85 = vmul.f32 %v76, %v84
    %v86 = vrcp.pop %v85
    %v87 = vmul.f32 %v85, %v86
    %v88 = vsub.f32 1.0, %v87
    %v89 = vmul.f32 %v86, %v88
    %v90 = vadd.f32 %v86, %v89
    %vm91 = vweird.f32 %v85
    %vm92 = vweird.f32 %v86
    %vm93 = vmor %vm91, %vm92
    %v94 = vsel %vm93, %v86, %v90
    %v95 = vand.u32 2147483647, %v85
    %vm96 = vcmp.eq.f32.partialorder %v95, 8.507059e+37
    %v97 = vand.u32 %v85, 2147483648
    %v98 = vor.u32 1.1754944e-38, %v97
    %v99 = vsel %vm96, %v98, %v94
    %v100 = vmul.f32 %v83, %v99
    %vm101 = vcmask 7168
    %102 = vst.msk [vmem:[%s2] sm:$0xff] %vm101, %v100
    // Predicated region
    $region18: #{tpu_custom_call.1} parent=1 // pred_check
      _
    $region19: #{tpu_custom_call.1} parent=1 // pred_check_branch
      %104 = sbr.rel (0) target = $region21
    $region20: #{tpu_custom_call.1} parent=1 // pred_region
      _
    $region21: #{tpu_custom_call.1} parent=1 // pred_fallthru
      _
    // Predicated region
    $region22: #{tpu_custom_call.1} parent=1 // pred_check
      _
    $region23: #{tpu_custom_call.1} parent=1 // pred_check_branch
      %106 = sbr.rel (0) target = $region25
    $region24: #{tpu_custom_call.1} parent=1 // pred_region
      _
    $region25: #{tpu_custom_call.1} parent=1 // pred_fallthru
      _
    %107 = vsyncpa [#allocation3], 1
    %108 = vsyncpa [#allocation5], 1

</llo_original>
